<compile_context>
chip_gen: v6e
topology: v6e:2x2x1
jax: 0.10.0
libtpu: 0.0.40
codegen_flags: <defaults>
</compile_context>

<pallas_src>
import functools

import jax
import jax.numpy as jnp
from jax import lax
from jax.experimental import pallas as pl
from jax.experimental.pallas import tpu as pltpu

ATTACH_IDX = 112          # scene.customAttachmentVertexIdx = [(0.0, [112])]
GRAVITY_Y = -9.8


# ---------------------------------------------------------------------------
# Single fused kernel: exp(log_phy_params) prologue + scalar time math +
# one vector epilogue.  State layout is lane-dense: (3, N_pad) float32,
# xyz on sublanes, particles on lanes.
# ---------------------------------------------------------------------------
def _sim_kernel(scalars_ref, coords_ref, logp_ref, x_out_ref, phy_out_ref,
                *, n_steps, apply_attach, use_closed_form, unroll):
    # phy_params = exp(self.phy_params)  (EUP op, effectively free here).
    phy_out_ref[...] = jnp.exp(logp_ref[...])

    dt = scalars_ref[0]
    decay = scalars_ref[1]
    g = scalars_ref[2]
    dt2g = dt * dt * g                                     # dt^2 * gravity

    d, n = coords_ref.shape                                # (3, N_pad)
    x0 = coords_ref[...]

    # TODO(synk): DiffCloth's implicit stretching/bending elastic solve
    # (dfc.makeSimFromConf + SimFunction.apply, driven by phy_params[:4]) is an
    # external C++ solver with no Pallas equivalent; only integration, decay
    # damping, gravity and the hard attachment constraint are reproduced here.
    #
    # With no inter-particle coupling the gravity displacement is identical for
    # every particle, so the whole time loop is scalar math (y-row only).
    if n_steps == 0:
        dy = jnp.float32(0.0)
    elif use_closed_form:
        # v_t = dt*g*(1-decay^t)/(1-decay);  dy = dt * sum_{t=1..T} v_t.
        t_f = jnp.float32(n_steps)
        one_minus = jnp.float32(1.0) - decay
        near_one = jnp.abs(one_minus) < jnp.float32(1e-7)
        den = jnp.where(near_one, jnp.float32(1.0), one_minus)
        # decay**T by repeated squaring at trace time (scalar muls only).
        decay_t = jnp.float32(1.0)
        p = decay
        e = n_steps
        while e:
            if e & 1:
                decay_t = decay_t * p
            p = p * p
            e >>= 1
        geo = (t_f - decay * (jnp.float32(1.0) - decay_t) / den) / den
        tri = jnp.float32(0.5 * n_steps * (n_steps + 1))   # decay == 1 limit
        dy = dt2g * jnp.where(near_one, tri, geo)
    else:
        # Loop form kept for when the elastic solve lands; carries u = dt*v
        # (one fewer vmul per step) and is scalar-only with partial unroll.
        def step(_, carry):
            disp, u = carry
            u = decay * u + dt2g
            return disp + u, u
        dy, _ = lax.fori_loop(
            0, n_steps, step, (jnp.float32(0.0), jnp.float32(0.0)),
            unroll=max(1, min(int(unroll), n_steps)))

    row_ids = lax.broadcasted_iota(jnp.int32, (d, n), 0)
    row1 = row_ids == 1
    x_final = x0 + jnp.where(row1, dy, jnp.float32(0.0))

    if apply_attach:
        # Final hard pin of vertex 112 to pos0[T-1] (per-step pins are shadowed).
        lane_ids = lax.broadcasted_iota(jnp.int32, (d, n), 1)
        attach_mask = lane_ids == ATTACH_IDX
        row0 = row_ids == 0
        px = scalars_ref[3]
        py = scalars_ref[4]
        pz = scalars_ref[5]
        pos_b = jnp.where(row0, px, jnp.where(row1, py, pz))
        x_final = jnp.where(attach_mask, pos_b, x_final)

    x_out_ref[...] = x_final


@functools.partial(jax.jit,
                   static_argnames=("n_time_steps", "use_closed_form", "unroll"))
def run_sim(coordinates, position_control, log_phy_params,
            decay, time_step, n_time_steps, use_closed_form=True, unroll=8):
    """coordinates: (N, 3) f32, position_control: (n_time_steps, 6) f32.

    Returns (x_t, phy_params) where x_t is the lane-dense (3, N) final state and
    phy_params = exp(log_phy_params).
    """
    coords = jnp.asarray(coordinates, jnp.float32)
    n = coords.shape[0]
    n_pad = max(128, ((n + 127) // 128) * 128)             # lane-dense output
    coords_t = jnp.zeros((3, n_pad), jnp.float32).at[:, :n].set(coords.T)

    # Only pos0[T-1] is needed in-kernel (attachment hoisted to the epilogue).
    if n_time_steps > 0:
        pos_last = jnp.asarray(position_control, jnp.float32)[n_time_steps - 1, :3]
    else:
        pos_last = jnp.zeros((3,), jnp.float32)
    scalars = jnp.concatenate([
        jnp.stack([jnp.float32(time_step), jnp.float32(decay),
                   jnp.float32(GRAVITY_Y)]),
        pos_last.astype(jnp.float32)])                      # (6,) SMEM

    n_logp = int(log_phy_params.shape[0])
    logp = jnp.zeros((1, 128), jnp.float32).at[0, :n_logp].set(
        jnp.asarray(log_phy_params, jnp.float32))

    kernel = functools.partial(
        _sim_kernel,
        n_steps=int(n_time_steps),
        apply_attach=bool(ATTACH_IDX < n) and int(n_time_steps) > 0,
        use_closed_form=bool(use_closed_form),
        unroll=int(unroll),
    )

    x_pad, phy = pl.pallas_call(
        kernel,
        out_shape=(jax.ShapeDtypeStruct((3, n_pad), jnp.float32),
                   jax.ShapeDtypeStruct((1, 128), jnp.float32)),
        in_specs=[
            pl.BlockSpec(memory_space=pltpu.MemorySpace.SMEM),   # scalars (6,)
            pl.BlockSpec(memory_space=pltpu.MemorySpace.VMEM),   # coords (3, N_pad)
            pl.BlockSpec(memory_space=pltpu.MemorySpace.VMEM),   # log phy params padded
        ],
        out_specs=(
            pl.BlockSpec(memory_space=pltpu.MemorySpace.VMEM),   # x (3, N_pad)
            pl.BlockSpec(memory_space=pltpu.MemorySpace.VMEM),   # exp(log phy params)
        ),
    )(scalars, coords_t, logp)
    return x_pad[:, :n], phy[0, :n_logp]


# ---------------------------------------------------------------------------
# SimDeform module equivalent
# ---------------------------------------------------------------------------
class SimDeform:
    def __init__(self, n_time_steps, time_step, n_threads, feat_size, gridNum,
                 scale=100.0, model_file=None):
        self.time_step = float(time_step)
        self.n_time_steps = int(n_time_steps)
        self.gridNumX, self.gridNumY = gridNum
        # Deterministic synthetic init of the 5 log physical parameters
        # (torch: log([1,10,800,0.05,0.3] + noise)); small noise keeps args > 0.
        base = jnp.array([1.0, 10.0, 800.0, 0.05, 0.3], jnp.float32)
        noise = (jax.random.uniform(jax.random.PRNGKey(0), (5,)) - 0.5) * 0.01
        self.phy_params = jnp.log(base * (1.0 + noise))
        # TODO(synk): dfc.enableOpenMP / makeOptimizeHelper / taskInfo flags are
        # host-side simulator configuration with no Pallas equivalent.

    def __call__(self, coordinates, position_control, decay):
        # Single fused, jitted kernel: exp(phy_params) + gravity/decay/attach
        # displacement on TPU.  (Dead glue pos1/db_pos from the reference is
        # unused downstream and therefore dropped.)
        x_t, phy_params = run_sim(jnp.asarray(coordinates, jnp.float32),
                                  jnp.asarray(position_control, jnp.float32),
                                  self.phy_params,
                                  float(decay), self.time_step,
                                  self.n_time_steps)
        # phy_params[:4] / phy_params[4] would drive the external elastic solve
        # (TODO(synk): no Pallas equivalent for the DiffCloth solver itself).
        _ = phy_params
        # DiffCloth returns the flat state vector x (length 3*N, xyz-interleaved).
        return x_t.T.reshape(-1)


if __name__ == "__main__":
    key = jax.random.PRNGKey(0)
    k1, k2 = jax.random.split(key)

    grid_num = (8, 16)                      # gridNumX, gridNumY -> N = 128 particles
    n_particles = grid_num[0] * grid_num[1]
    n_time_steps = 8
    time_step = 0.01
    decay = 0.95

    # Initial particle positions: regular grid + small deterministic jitter.
    gx, gy = jnp.meshgrid(jnp.arange(grid_num[0], dtype=jnp.float32),
                          jnp.arange(grid_num[1], dtype=jnp.float32),
                          indexing="ij")
    coordinates = jnp.stack(
        [gx.reshape(-1) * 0.1, jnp.zeros((n_particles,), jnp.float32),
         gy.reshape(-1) * 0.1], axis=-1)
    coordinates = coordinates + 0.001 * jax.random.normal(k1, (n_particles, 3))

    # Control trajectory (pos0 | pos1), one row per time step.
    position_control = 0.1 * jax.random.normal(k2, (n_time_steps, 6))

    model = SimDeform(n_time_steps=n_time_steps, time_step=time_step,
                      n_threads=1, feat_size=32, gridNum=grid_num)

    x = model(coordinates, position_control, decay)
    jax.block_until_ready(x)
    assert x.shape == (3 * n_particles,)
    assert jnp.all(jnp.isfinite(x))

    # Cross-check the closed form against the explicit per-step loop variant.
    x_loop, _ = run_sim(coordinates, position_control, model.phy_params,
                        decay, time_step, n_time_steps, use_closed_form=False)
    x_closed, _ = run_sim(coordinates, position_control, model.phy_params,
                          decay, time_step, n_time_steps, use_closed_form=True)
    jax.block_until_ready((x_loop, x_closed))
    assert jnp.allclose(x_loop, x_closed, atol=1e-5, rtol=1e-5)
    print("KERNEL_OK")
</pallas_src>

<mosaic_0001>
module attributes {stable_mosaic.version = 11 : i64} {
  func.func @_sim_kernel(%arg0: memref<6xf32, #tpu.memory_space<smem>>, %arg1: memref<3x128xf32, #tpu.memory_space<vmem>>, %arg2: memref<1x128xf32, #tpu.memory_space<vmem>>, %arg3: memref<3x128xf32, #tpu.memory_space<vmem>>, %arg4: memref<1x128xf32, #tpu.memory_space<vmem>>) attributes {dimension_semantics = [], scalar_prefetch = 0 : i64, scratch_operands = 0 : i64, tpu.core_type = #tpu.core_type<tc>} {
    %c0 = arith.constant 0 : index
    %c0_0 = arith.constant 0 : index
    %0 = vector.load %arg2[%c0, %c0_0] : memref<1x128xf32, #tpu.memory_space<vmem>>, vector<1x128xf32>
    %1 = math.exp %0 : vector<1x128xf32>
    %c0_1 = arith.constant 0 : index
    %c0_2 = arith.constant 0 : index
    %2 = vector.load %arg4[%c0_1, %c0_2] : memref<1x128xf32, #tpu.memory_space<vmem>>, vector<1x128xf32>
    tpu.vector_store %arg4[%c0_1, %c0_2], %1 {strides = array<i32>} : memref<1x128xf32, #tpu.memory_space<vmem>>, vector<1x128xf32>,
    %c0_3 = arith.constant 0 : index
    %3 = memref.load %arg0[%c0_3] : memref<6xf32, #tpu.memory_space<smem>>
    %c1 = arith.constant 1 : index
    %4 = memref.load %arg0[%c1] : memref<6xf32, #tpu.memory_space<smem>>
    %c2 = arith.constant 2 : index
    %5 = memref.load %arg0[%c2] : memref<6xf32, #tpu.memory_space<smem>>
    %6 = arith.mulf %3, %3 : f32
    %7 = arith.mulf %6, %5 : f32
    %c0_4 = arith.constant 0 : index
    %c0_5 = arith.constant 0 : index
    %8 = vector.load %arg1[%c0_4, %c0_5] : memref<3x128xf32, #tpu.memory_space<vmem>>, vector<3x128xf32>
    %cst = arith.constant 1.000000e+00 : f32
    %9 = arith.subf %cst, %4 : f32
    %10 = math.absf %9 : f32
    %cst_6 = arith.constant 1.000000e-07 : f32
    %11 = arith.cmpf olt, %10, %cst_6 : f32
    %cst_7 = arith.constant 1.000000e+00 : f32
    %12 = arith.select %11, %cst_7, %9 : f32
    %13 = arith.mulf %4, %4 : f32
    %14 = arith.mulf %13, %13 : f32
    %15 = arith.mulf %14, %14 : f32
    %cst_8 = arith.constant 1.000000e+00 : f32
    %16 = arith.mulf %cst_8, %15 : f32
    %cst_9 = arith.constant 1.000000e+00 : f32
    %17 = arith.subf %cst_9, %16 : f32
    %18 = arith.mulf %4, %17 : f32
    %19 = arith.divf %18, %12 : f32
    %cst_10 = arith.constant 8.000000e+00 : f32
    %20 = arith.subf %cst_10, %19 : f32
    %21 = arith.divf %20, %12 : f32
    %cst_11 = arith.constant 3.600000e+01 : f32
    %22 = arith.select %11, %cst_11, %21 : f32
    %23 = arith.mulf %7, %22 : f32
    %24 = tpu.iota {dimensions = array<i32: 0>} : vector<3x128xi32>
    %c1_i32 = arith.constant 1 : i32
    %25 = vector.broadcast %c1_i32 : i32 to vector<3x128xi32>
    %26 = arith.cmpi eq, %24, %25 : vector<3x128xi32>
    %cst_12 = arith.constant 0.000000e+00 : f32
    %27 = vector.broadcast %23 : f32 to vector<3x128xf32>
    %28 = vector.broadcast %cst_12 : f32 to vector<3x128xf32>
    %29 = arith.select %26, %27, %28 : vector<3x128xi1>, vector<3x128xf32>
    %30 = arith.addf %8, %29 : vector<3x128xf32>
    %31 = tpu.iota {dimensions = array<i32: 1>} : vector<3x128xi32>
    %c112_i32 = arith.constant 112 : i32
    %32 = vector.broadcast %c112_i32 : i32 to vector<3x128xi32>
    %33 = arith.cmpi eq, %31, %32 : vector<3x128xi32>
    %c0_i32 = arith.constant 0 : i32
    %34 = vector.broadcast %c0_i32 : i32 to vector<3x128xi32>
    %35 = arith.cmpi eq, %24, %34 : vector<3x128xi32>
    %c3 = arith.constant 3 : index
    %36 = memref.load %arg0[%c3] : memref<6xf32, #tpu.memory_space<smem>>
    %c4 = arith.constant 4 : index
    %37 = memref.load %arg0[%c4] : memref<6xf32, #tpu.memory_space<smem>>
    %c5 = arith.constant 5 : index
    %38 = memref.load %arg0[%c5] : memref<6xf32, #tpu.memory_space<smem>>
    %39 = vector.broadcast %37 : f32 to vector<3x128xf32>
    %40 = vector.broadcast %38 : f32 to vector<3x128xf32>
    %41 = arith.select %26, %39, %40 : vector<3x128xi1>, vector<3x128xf32>
    %42 = vector.broadcast %36 : f32 to vector<3x128xf32>
    %43 = arith.select %35, %42, %41 : vector<3x128xi1>, vector<3x128xf32>
    %44 = arith.select %33, %43, %30 : vector<3x128xi1>, vector<3x128xf32>
    %c0_13 = arith.constant 0 : index
    %c0_14 = arith.constant 0 : index
    %45 = vector.load %arg3[%c0_13, %c0_14] : memref<3x128xf32, #tpu.memory_space<vmem>>, vector<3x128xf32>
    tpu.vector_store %arg3[%c0_13, %c0_14], %44 {strides = array<i32>} : memref<3x128xf32, #tpu.memory_space<vmem>>, vector<3x128xf32>,
    return
  }
}

</mosaic_0001>

<llo_original>
// kernel: run_sim.1
$region0: #{run_sim.1}
  #allocation0 [shape = 'u32[]', space=smem, size = 0x4, offset = 0x4, fixed_abs, tag = 'smem constant byte address 0x4 - core index']
  #allocation1 [shape = 'u32[144,128]{1,0:T(1,128)}', space=vmem, size = 0x12000, scoped, tag = 'internal scratch']
  %s0 = inlined_call_operand.vmem [shape: f32[6], index: 0, kind: input, shape index: {}]
  %s1 = inlined_call_operand.vmem [shape: f32[3,128], index: 1, kind: input, shape index: {}]
  %s2 = inlined_call_operand.vmem [shape: f32[1,128], index: 2, kind: input, shape index: {}]
  %s3 = inlined_call_operand.hbm [shape: f32[3,128], index: 3, kind: output, shape index: {0}]
  %s4 = inlined_call_operand.vmem [shape: f32[1,128], index: 4, kind: output, shape index: {1}]
  %5 = xla_tuple %s3, %s4
  %s6 = sld [smem:[#allocation0]]
  $region34: #{run_sim.1} parent=0
    _
  %s8 = ssub.s32 1, %s6
  %s9 = scalar_select 0, %s8, %s6
  $region1: #{run_sim.1} parent=0
    #allocation2 [shape = 'u8[512]{0}', space=smem, size = 0x200, scoped, tag = 'input window, operand 0, single buffered']
    #allocation3 [shape = 's32[1]{0}', space=sflag, size = 0x4, scoped, tag = 'scoped memory for run_sim.1']
    #allocation4 [shape = 's32[1]{0}', space=sflag, size = 0x4, scoped, tag = 'scoped memory for run_sim.1']
    #allocation5 [shape = 'u8[2048]{0}', space=vmem, size = 0x800, scoped, tag = 'output window, operand 0, single buffered']
    %10 = vsyncpa [#allocation4], 0
    %11 = vsyncpa [#allocation3], 0
    // Predicated region
    $region2: #{run_sim.1} parent=1 // pred_check
      _
    $region3: #{run_sim.1} parent=1 // pred_check_branch
      %13 = sbr.rel (0) target = $region5
    $region4: #{run_sim.1} parent=1 // pred_region
      %s15 = ssub.s32 16, 16
      %16 = vsyncadd [#allocation4], %s15
      %s18 = sshll.u32 %s0, 4
      %s19 = int_to_ptr.vmem [resolvable:$true] %s18
      %21 = dma.vmem_to_smem %s19, 16, [#allocation2], [#allocation4]
    $region5: #{run_sim.1} parent=1 // pred_fallthru
      _
    // Predicated region
    $region6: #{run_sim.1} parent=1 // pred_check
      _
    $region7: #{run_sim.1} parent=1 // pred_check_branch
      %23 = sbr.rel (0) target = $region9
    $region8: #{run_sim.1} parent=1 // pred_region
      _
    $region9: #{run_sim.1} parent=1 // pred_fallthru
      _
    // Predicated region
    $region10: #{run_sim.1} parent=1 // pred_check
      _
    $region11: #{run_sim.1} parent=1 // pred_check_branch
      %25 = sbr.rel (0) target = $region13
    $region12: #{run_sim.1} parent=1 // pred_region
      _
    $region13: #{run_sim.1} parent=1 // pred_fallthru
      _
    // Predicated region
    $region14: #{run_sim.1} parent=1 // pred_check
      _
    $region15: #{run_sim.1} parent=1 // pred_check_branch
      %27 = sbr.rel (0) target = $region17
    $region16: #{run_sim.1} parent=1 // pred_region
      %28 = dma.done [#allocation4], 16
    $region17: #{run_sim.1} parent=1 // pred_fallthru
      _
    %29 = sfence
    %v30 = vld [vmem:[%s2] sm:$0x1]
    %v31 = vmul.f32 %v30, 1.442695
    %v32 = vpow.pop %v31
    %33 = vst [vmem:[%s4] sm:$0x1] %v32
    %s34 = sld [smem:[#allocation2]]
    %s35 = sld [smem:[#allocation2 + $0x1]]
    %s36 = sld [smem:[#allocation2 + $0x2]]
    %s37 = smul.f32 %s34, %s34
    %s38 = smul.f32 %s37, %s36
    %v39 = vld [vmem:[%s1] sm:$0x7]
    %s40 = ssub.f32 1.0, %s35
    %s41 = sand.u32 2147483647, %s40
    %p42 = scmp.lt.f32.partialorder %s41, 1e-07
    %s43 = scalar_select %p42, 1.0, %s40
    %s44 = smul.f32 %s35, %s35
    %s45 = smul.f32 %s44, %s44
    %s46 = smul.f32 %s45, %s45
    %s47 = ssub.f32 1.0, %s46
    %s48 = smul.f32 %s35, %s47
    %v49 = vstv %s43
    %v50 = vrcp.pop %v49
    %s51 = vtos %v50
    %s52 = smul.f32 %s48, %s51
    %s53 = ssub.f32 8.0, %s52
    %v54 = vstv %s43
    %v55 = vrcp.pop %v54
    %s56 = vtos %v55
    %s57 = smul.f32 %s53, %s56
    %s58 = scalar_select %p42, 36.0, %s57
    %s59 = smul.f32 %s38, %s58
    %v60 = vlaneseq
    %v61 = vshrl.u32 %v60, 7
    %vm62 = vcmp.eq.s32.totalorder %v61, 1
    %v63 = vstv %s59
    %v64 = vsel %vm62, %v63, 0.0
    %v65 = vadd.f32 %v39, %v64
    %v66 = vlaneseq
    %v67 = vand.u32 %v66, 127
    %vm68 = vcmp.eq.s32.totalorder %v67, 112
    %vm69 = vcmp.eq.s32.totalorder %v61, 0
    %s70 = sld [smem:[#allocation2 + $0x3]]
    %s71 = sld [smem:[#allocation2 + $0x4]]
    %s72 = sld [smem:[#allocation2 + $0x5]]
    %v73 = vstv %s71
    %v74 = vstv %s72
    %v75 = vsel %vm62, %v73, %v74
    %v76 = vstv %s70
    %v77 = vsel %vm69, %v76, %v75
    %v78 = vsel %vm68, %v77, %v65
    %79 = vst [vmem:[#allocation5] sm:$0x7] %v78
    // Predicated region
    $region18: #{run_sim.1} parent=1 // pred_check
      _
    $region19: #{run_sim.1} parent=1 // pred_check_branch
      %81 = sbr.rel (0) target = $region21
    $region20: #{run_sim.1} parent=1 // pred_region
      %s83 = ssub.s32 64, 64
      %84 = vsyncadd [#allocation3], %s83
      %s86 = sshll.u32 [#allocation5], 4
      %s87 = int_to_ptr.vmem [resolvable:$true] %s86
      %89 = dma.vmem_to_hbm [thread:$0]  %s87, 64, %s3, [#allocation3]
    $region21: #{run_sim.1} parent=1 // pred_fallthru
      _
    // Predicated region
    $region22: #{run_sim.1} parent=1 // pred_check
      _
    $region23: #{run_sim.1} parent=1 // pred_check_branch
      %91 = sbr.rel (0) target = $region25
    $region24: #{run_sim.1} parent=1 // pred_region
      _
    $region25: #{run_sim.1} parent=1 // pred_fallthru
      _
    // Predicated region
    $region26: #{run_sim.1} parent=1 // pred_check
      _
    $region27: #{run_sim.1} parent=1 // pred_check_branch
      %93 = sbr.rel (0) target = $region29
    $region28: #{run_sim.1} parent=1 // pred_region
      %94 = dma.done [#allocation3], 64
    $region29: #{run_sim.1} parent=1 // pred_fallthru
      _
    // Predicated region
    $region30: #{run_sim.1} parent=1 // pred_check
      _
    $region31: #{run_sim.1} parent=1 // pred_check_branch
      %96 = sbr.rel (0) target = $region33
    $region32: #{run_sim.1} parent=1 // pred_region
      _
    $region33: #{run_sim.1} parent=1 // pred_fallthru
      _
    %97 = vsyncpa [#allocation3], 1
    %98 = vsyncpa [#allocation4], 1

</llo_original>
